<compile_context>
chip_gen: v7x
topology: tpu7x:2x2x1
jax: 0.10.0
libtpu: 0.0.40
codegen_flags: <defaults>
</compile_context>

<pallas_src>
import jax
import jax.numpy as jnp
from jax.experimental import pallas as pl
from jax.experimental.pallas import tpu as pltpu

HIDDEN = 50
OUT_DIM = 3
HIDDEN_PAD = 128   # lane-dense hidden width
OUT_PAD = 128      # lane-dense logits width (only OUT_DIM columns are stored)
NEG_LARGE = -1e30  # padded softmax lanes -> exp() == 0 (f32 epilogue; do not move to fp16)


def mlp_kernel(x_ref, w1_ref, b1_ref, w2_ref, b2_ref, w3_ref, b3_ref, o_ref):
    # Cast x in-kernel (free VPU filler); the wrapper never re-materializes x.
    x = x_ref[...].astype(w1_ref.dtype)

    # layer1 + ReLU  (MXU matmul, f32 accumulate; bias add + relu on VPU)
    h1 = jnp.dot(x, w1_ref[...], preferred_element_type=jnp.float32) + b1_ref[...]
    h1 = jnp.maximum(h1, 0.0).astype(w2_ref.dtype)

    # layer2 + ReLU
    h2 = jnp.dot(h1, w2_ref[...], preferred_element_type=jnp.float32) + b2_ref[...]
    h2 = jnp.maximum(h2, 0.0).astype(w3_ref.dtype)

    # layer3 + softmax over the (padded) feature axis.  Padded lanes carry a huge
    # negative bias so they contribute exactly 0 to the softmax denominator.
    logits = jnp.dot(h2, w3_ref[...], preferred_element_type=jnp.float32) + b3_ref[...]
    m = jnp.max(logits, axis=-1, keepdims=True)
    e = jnp.exp(logits - m)
    denom = jnp.sum(e, axis=-1, keepdims=True)
    # Exact normalization; store only the OUT_DIM useful columns (12 B/row, not 512 B).
    o_ref[...] = (e[:, :OUT_DIM] / denom).astype(o_ref.dtype)


def _round_up(n, m):
    return ((n + m - 1) // m) * m


def pad_params(params, compute_dtype=jnp.float32):
    """Pad (in,out)-layout params to lane-dense widths; optionally quantize weights."""
    w1, b1, w2, b2, w3, b3 = params
    in_dim = w1.shape[0]
    f32 = jnp.float32
    w1p = jnp.zeros((in_dim, HIDDEN_PAD), f32).at[:, :HIDDEN].set(w1)
    b1p = jnp.zeros((1, HIDDEN_PAD), f32).at[:, :HIDDEN].set(b1)
    w2p = jnp.zeros((HIDDEN_PAD, HIDDEN_PAD), f32).at[:HIDDEN, :HIDDEN].set(w2)
    b2p = jnp.zeros((1, HIDDEN_PAD), f32).at[:, :HIDDEN].set(b2)
    w3p = jnp.zeros((HIDDEN_PAD, OUT_PAD), f32).at[:HIDDEN, :OUT_DIM].set(w3)
    # Padded logit lanes get a huge negative bias -> softmax over padding is exact.
    b3p = jnp.full((1, OUT_PAD), NEG_LARGE, f32).at[:, :OUT_DIM].set(b3)
    # Biases stay f32 (bias add / softmax run in f32); weights may be bf16 for
    # large-batch throughput runs (esp. v5e, where f32 matmul is multi-pass on the MXU).
    w1p, w2p, w3p = (w.astype(compute_dtype) for w in (w1p, w2p, w3p))
    return w1p, b1p, w2p, b2p, w3p, b3p


def _choose_block_m(batch, in_dim, x_itemsize, block_m):
    """Row tile: capped by block_m, the (rounded) batch, a >=4-step target for large
    batches (v7x megacore), and a VMEM guard on the double-buffered x tile."""
    rows = _round_up(batch, 8)
    target = max(8, _round_up(-(-batch // 4), 8))
    vmem_rows = max(8, (((8 << 20) // max(1, 2 * in_dim * x_itemsize)) // 8) * 8)
    return min(block_m, rows, target, vmem_rows)


def mlp_forward(x, padded_params, *, block_m=1024):
    """x: (batch, input_dim).  padded_params: output of pad_params()."""
    w1, b1, w2, b2, w3, b3 = padded_params
    batch, in_dim = x.shape

    bm = _choose_block_m(batch, in_dim, x.dtype.itemsize, block_m)
    padded_batch = _round_up(batch, bm)
    if padded_batch != batch:
        x = jnp.pad(x, ((0, padded_batch - batch), (0, 0)))

    # Weights/biases: constant index_map -> fetched once, VMEM-resident across steps.
    resident = lambda a: pl.BlockSpec(a.shape, lambda i: (0, 0))

    out = pl.pallas_call(
        mlp_kernel,
        out_shape=jax.ShapeDtypeStruct((padded_batch, OUT_DIM), jnp.float32),
        grid=(padded_batch // bm,),
        in_specs=[
            pl.BlockSpec((bm, in_dim), lambda i: (i, 0)),
            resident(w1), resident(b1),
            resident(w2), resident(b2),
            resident(w3), resident(b3),
        ],
        out_specs=pl.BlockSpec((bm, OUT_DIM), lambda i: (i, 0)),
        compiler_params=pltpu.CompilerParams(
            dimension_semantics=("parallel",),
        ),
    )(x, w1, b1, w2, b2, w3, b3)

    # Only padded rows (if any) need slicing away; the feature axis is already OUT_DIM.
    return out if padded_batch == batch else out[:batch]


def init_params(key, input_dim):
    # Deterministic init mimicking nn.Linear default: U(-1/sqrt(fan_in), 1/sqrt(fan_in)),
    # stored transposed as (in_features, out_features).
    def linear(key, fan_in, fan_out):
        kw, kb = jax.random.split(key)
        bound = 1.0 / jnp.sqrt(fan_in)
        w = jax.random.uniform(kw, (fan_in, fan_out), jnp.float32, -bound, bound)
        b = jax.random.uniform(kb, (1, fan_out), jnp.float32, -bound, bound)
        return w, b

    k1, k2, k3 = jax.random.split(key, 3)
    w1, b1 = linear(k1, input_dim, HIDDEN)
    w2, b2 = linear(k2, HIDDEN, HIDDEN)
    w3, b3 = linear(k3, HIDDEN, OUT_DIM)
    return w1, b1, w2, b2, w3, b3


def reference(x, params):
    w1, b1, w2, b2, w3, b3 = params
    h1 = jax.nn.relu(x @ w1 + b1)
    h2 = jax.nn.relu(h1 @ w2 + b2)
    return jax.nn.softmax(h2 @ w3 + b3, axis=1)


if __name__ == "__main__":
    key = jax.random.PRNGKey(0)
    kx, kp = jax.random.split(key)

    batch, input_dim = 8, 32
    x = jax.random.normal(kx, (batch, input_dim), dtype=jnp.float32)
    params = init_params(kp, input_dim)

    # f32 compute for the exactness check; pass compute_dtype=jnp.bfloat16 for
    # large-batch throughput runs (use a looser tolerance in that mode).
    padded_params = pad_params(params, compute_dtype=jnp.float32)

    out = mlp_forward(x, padded_params)
    out = jax.block_until_ready(out)

    ref = reference(x, params)
    assert out.shape == (batch, OUT_DIM)
    assert jnp.allclose(out, ref, atol=1e-5, rtol=1e-5), "mismatch vs reference"
    assert jnp.allclose(jnp.sum(out, axis=1), 1.0, atol=1e-5), "softmax rows must sum to 1"

    print("KERNEL_OK")
</pallas_src>

<mosaic_0001>
module attributes {stable_mosaic.version = 11 : i64} {
  func.func @mlp_kernel(%arg0: i32, %arg1: memref<8x32xf32, #tpu.memory_space<vmem>>, %arg2: memref<32x128xf32, #tpu.memory_space<vmem>>, %arg3: memref<1x128xf32, #tpu.memory_space<vmem>>, %arg4: memref<128x128xf32, #tpu.memory_space<vmem>>, %arg5: memref<1x128xf32, #tpu.memory_space<vmem>>, %arg6: memref<128x128xf32, #tpu.memory_space<vmem>>, %arg7: memref<1x128xf32, #tpu.memory_space<vmem>>, %arg8: memref<8x3xf32, #tpu.memory_space<vmem>>) attributes {dimension_semantics = [#tpu.dimension_semantics<parallel>], iteration_bounds = array<i64: 1>, scalar_prefetch = 0 : i64, scratch_operands = 0 : i64, tpu.core_type = #tpu.core_type<tc>, window_params = [{transform_indices = @transform_0, window_bounds = array<i64: 8, 32>}, {pipeline_mode = #tpu.pipeline_mode<synchronous>, transform_indices = @transform_1, window_bounds = array<i64: 32, 128>}, {pipeline_mode = #tpu.pipeline_mode<synchronous>, transform_indices = @transform_2, window_bounds = array<i64: 1, 128>}, {pipeline_mode = #tpu.pipeline_mode<synchronous>, transform_indices = @transform_3, window_bounds = array<i64: 128, 128>}, {pipeline_mode = #tpu.pipeline_mode<synchronous>, transform_indices = @transform_4, window_bounds = array<i64: 1, 128>}, {pipeline_mode = #tpu.pipeline_mode<synchronous>, transform_indices = @transform_5, window_bounds = array<i64: 128, 128>}, {pipeline_mode = #tpu.pipeline_mode<synchronous>, transform_indices = @transform_6, window_bounds = array<i64: 1, 128>}, {transform_indices = @transform_7, window_bounds = array<i64: 8, 3>}]} {
    %c0 = arith.constant 0 : index
    %c0_0 = arith.constant 0 : index
    %0 = vector.load %arg1[%c0, %c0_0] : memref<8x32xf32, #tpu.memory_space<vmem>>, vector<8x32xf32>
    %c0_1 = arith.constant 0 : index
    %c0_2 = arith.constant 0 : index
    %1 = vector.load %arg2[%c0_1, %c0_2] : memref<32x128xf32, #tpu.memory_space<vmem>>, vector<32x128xf32>
    %cst = arith.constant dense<0.000000e+00> : vector<8x128xf32>
    %2 = tpu.matmul %0, %1, %cst {dimension_numbers = #tpu.dot_dimension_numbers<[1], [0], [0], [1], [0, 0, 1, 1], [], []>} : vector<8x32xf32>, vector<32x128xf32>, vector<8x128xf32> -> vector<8x128xf32>
    %c0_3 = arith.constant 0 : index
    %c0_4 = arith.constant 0 : index
    %3 = vector.load %arg3[%c0_3, %c0_4] : memref<1x128xf32, #tpu.memory_space<vmem>>, vector<1x128xf32>
    %4 = vector.broadcast %3 : vector<1x128xf32> to vector<8x128xf32>
    %5 = arith.addf %2, %4 : vector<8x128xf32>
    %cst_5 = arith.constant 0.000000e+00 : f32
    %6 = vector.broadcast %cst_5 : f32 to vector<8x128xf32>
    %7 = arith.maximumf %5, %6 : vector<8x128xf32>
    %c0_6 = arith.constant 0 : index
    %c0_7 = arith.constant 0 : index
    %8 = vector.load %arg4[%c0_6, %c0_7] : memref<128x128xf32, #tpu.memory_space<vmem>>, vector<128x128xf32>
    %cst_8 = arith.constant dense<0.000000e+00> : vector<8x128xf32>
    %9 = tpu.matmul %7, %8, %cst_8 {dimension_numbers = #tpu.dot_dimension_numbers<[1], [0], [0], [1], [0, 0, 1, 1], [], []>} : vector<8x128xf32>, vector<128x128xf32>, vector<8x128xf32> -> vector<8x128xf32>
    %c0_9 = arith.constant 0 : index
    %c0_10 = arith.constant 0 : index
    %10 = vector.load %arg5[%c0_9, %c0_10] : memref<1x128xf32, #tpu.memory_space<vmem>>, vector<1x128xf32>
    %11 = vector.broadcast %10 : vector<1x128xf32> to vector<8x128xf32>
    %12 = arith.addf %9, %11 : vector<8x128xf32>
    %cst_11 = arith.constant 0.000000e+00 : f32
    %13 = vector.broadcast %cst_11 : f32 to vector<8x128xf32>
    %14 = arith.maximumf %12, %13 : vector<8x128xf32>
    %c0_12 = arith.constant 0 : index
    %c0_13 = arith.constant 0 : index
    %15 = vector.load %arg6[%c0_12, %c0_13] : memref<128x128xf32, #tpu.memory_space<vmem>>, vector<128x128xf32>
    %cst_14 = arith.constant dense<0.000000e+00> : vector<8x128xf32>
    %16 = tpu.matmul %14, %15, %cst_14 {dimension_numbers = #tpu.dot_dimension_numbers<[1], [0], [0], [1], [0, 0, 1, 1], [], []>} : vector<8x128xf32>, vector<128x128xf32>, vector<8x128xf32> -> vector<8x128xf32>
    %c0_15 = arith.constant 0 : index
    %c0_16 = arith.constant 0 : index
    %17 = vector.load %arg7[%c0_15, %c0_16] : memref<1x128xf32, #tpu.memory_space<vmem>>, vector<1x128xf32>
    %18 = vector.broadcast %17 : vector<1x128xf32> to vector<8x128xf32>
    %19 = arith.addf %16, %18 : vector<8x128xf32>
    %cst_17 = arith.constant dense<0xFF800000> : vector<8xf32>
    %20 = vector.multi_reduction <maximumf>, %19, %cst_17 [1] : vector<8x128xf32> to vector<8xf32>
    %21 = vector.shape_cast %20 : vector<8xf32> to vector<8x1xf32>
    %22 = vector.broadcast %21 : vector<8x1xf32> to vector<8x128xf32>
    %23 = arith.subf %19, %22 : vector<8x128xf32>
    %24 = math.exp %23 : vector<8x128xf32>
    %cst_18 = arith.constant dense<0.000000e+00> : vector<8xf32>
    %25 = vector.multi_reduction <add>, %24, %cst_18 [1] : vector<8x128xf32> to vector<8xf32>
    %26 = vector.shape_cast %25 : vector<8xf32> to vector<8x1xf32>
    %27 = vector.extract_strided_slice %24 {offsets = [0, 0], sizes = [8, 3], strides = [1, 1]} : vector<8x128xf32> to vector<8x3xf32>
    %28 = vector.broadcast %26 : vector<8x1xf32> to vector<8x3xf32>
    %29 = arith.divf %27, %28 : vector<8x3xf32>
    %c0_19 = arith.constant 0 : index
    %c0_20 = arith.constant 0 : index
    %30 = vector.load %arg8[%c0_19, %c0_20] : memref<8x3xf32, #tpu.memory_space<vmem>>, vector<8x3xf32>
    tpu.vector_store %arg8[%c0_19, %c0_20], %29 {strides = array<i32>} : memref<8x3xf32, #tpu.memory_space<vmem>>, vector<8x3xf32>,
    return
  }
  func.func @transform_0(%arg0: i32) -> (i32, i32) {
    %c0_i32 = arith.constant 0 : i32
    %c0_i32_0 = arith.constant 0 : i32
    return %arg0, %c0_i32 : i32, i32
  }
  func.func @transform_1(%arg0: i32) -> (i32, i32) {
    %c0_i32 = arith.constant 0 : i32
    %c0_i32_0 = arith.constant 0 : i32
    %c0_i32_1 = arith.constant 0 : i32
    return %c0_i32, %c0_i32_0 : i32, i32
  }
  func.func @transform_2(%arg0: i32) -> (i32, i32) {
    %c0_i32 = arith.constant 0 : i32
    %c0_i32_0 = arith.constant 0 : i32
    %c0_i32_1 = arith.constant 0 : i32
    return %c0_i32, %c0_i32_0 : i32, i32
  }
  func.func @transform_3(%arg0: i32) -> (i32, i32) {
    %c0_i32 = arith.constant 0 : i32
    %c0_i32_0 = arith.constant 0 : i32
    %c0_i32_1 = arith.constant 0 : i32
    return %c0_i32, %c0_i32_0 : i32, i32
  }
  func.func @transform_4(%arg0: i32) -> (i32, i32) {
    %c0_i32 = arith.constant 0 : i32
    %c0_i32_0 = arith.constant 0 : i32
    %c0_i32_1 = arith.constant 0 : i32
    return %c0_i32, %c0_i32_0 : i32, i32
  }
  func.func @transform_5(%arg0: i32) -> (i32, i32) {
    %c0_i32 = arith.constant 0 : i32
    %c0_i32_0 = arith.constant 0 : i32
    %c0_i32_1 = arith.constant 0 : i32
    return %c0_i32, %c0_i32_0 : i32, i32
  }
  func.func @transform_6(%arg0: i32) -> (i32, i32) {
    %c0_i32 = arith.constant 0 : i32
    %c0_i32_0 = arith.constant 0 : i32
    %c0_i32_1 = arith.constant 0 : i32
    return %c0_i32, %c0_i32_0 : i32, i32
  }
  func.func @transform_7(%arg0: i32) -> (i32, i32) {
    %c0_i32 = arith.constant 0 : i32
    %c0_i32_0 = arith.constant 0 : i32
    return %arg0, %c0_i32 : i32, i32
  }
}

</mosaic_0001>

<llo_original>
// kernel: tpu_custom_call.1
$region0: #{tpu_custom_call.1}
  #allocation0 [shape = 'u32[]', space=smem, size = 0x4, offset = 0x4, fixed_abs, tag = 'smem constant byte address 0x4 - core index']
  #allocation1 [shape = 'u32[144,128]{1,0:T(1,128)}', space=vmem, size = 0x12000, scoped, tag = 'internal scratch']
  %s0 = inlined_call_operand.hbm [shape: f32[8,32], index: 0, kind: input, shape index: {}]
  %s1 = inlined_call_operand.hbm [shape: f32[32,128], index: 1, kind: input, shape index: {}]
  %s2 = inlined_call_operand.vmem [shape: f32[1,128], index: 2, kind: input, shape index: {}]
  %s3 = inlined_call_operand.hbm [shape: f32[128,128], index: 3, kind: input, shape index: {}]
  %s4 = inlined_call_operand.vmem [shape: f32[1,128], index: 4, kind: input, shape index: {}]
  %s5 = inlined_call_operand.hbm [shape: f32[128,128], index: 5, kind: input, shape index: {}]
  %s6 = inlined_call_operand.vmem [shape: f32[1,128], index: 6, kind: input, shape index: {}]
  %s7 = inlined_call_operand.vmem [shape: f32[8,3], index: 7, kind: output, shape index: {}]
  %s8 = sld [smem:[#allocation0]]
  $region54: #{tpu_custom_call.1} parent=0
    _
  %s10 = ssub.s32 1, %s8
  %s11 = scalar_select 0, %s10, %s8
  $region1: #{tpu_custom_call.1} parent=0
    #allocation2 [shape = 'u8[4096]{0}', space=vmem, size = 0x1000, scoped, tag = 'input window, operand 0, single buffered']
    #allocation3 [shape = 's32[1]{0}', space=sflag, size = 0x4, scoped, tag = 'scoped memory for tpu_custom_call.1']
    #allocation4 [shape = 'u8[16384]{0}', space=vmem, size = 0x4000, scoped, tag = 'input window, operand 1, single buffered']
    #allocation5 [shape = 's32[1]{0}', space=sflag, size = 0x4, scoped, tag = 'scoped memory for tpu_custom_call.1']
    #allocation6 [shape = 'u8[65536]{0}', space=vmem, size = 0x10000, scoped, tag = 'input window, operand 3, single buffered']
    #allocation7 [shape = 'u8[65536]{0}', space=vmem, size = 0x10000, scoped, tag = 'input window, operand 5, single buffered']
    #allocation8 [shape = 's32[1]{0}', space=sflag, size = 0x4, scoped, tag = 'scoped memory for tpu_custom_call.1']
    %12 = vsyncpa [#allocation3], 0
    %13 = vsyncpa [#allocation5], 0
    %14 = vsyncpa [#allocation8], 0
    // Predicated region
    $region2: #{tpu_custom_call.1} parent=1 // pred_check
      _
    $region3: #{tpu_custom_call.1} parent=1 // pred_check_branch
      %16 = sbr.rel (0) target = $region5
    $region4: #{tpu_custom_call.1} parent=1 // pred_region
      %s18 = ssub.s32 128, 128
      %19 = vsyncadd [#allocation3], %s18
      %s21 = sshll.u32 [#allocation2], 4
      %s22 = int_to_ptr.vmem [resolvable:$true] %s21
      %24 = dma.hbm_to_vmem [thread:$0]  %s0, 128, %s22, [#allocation3]
    $region5: #{tpu_custom_call.1} parent=1 // pred_fallthru
      _
    // Predicated region
    $region6: #{tpu_custom_call.1} parent=1 // pred_check
      _
    $region7: #{tpu_custom_call.1} parent=1 // pred_check_branch
      %26 = sbr.rel (0) target = $region9
    $region8: #{tpu_custom_call.1} parent=1 // pred_region
      %s28 = ssub.s32 512, 512
      %29 = vsyncadd [#allocation5], %s28
      %s30 = sshll.u32 [#allocation4], 4
      %s31 = int_to_ptr.vmem [resolvable:$true] %s30
      %36 = dma.hbm_to_vmem [thread:$0]  %s1, 512, %s31, [#allocation5], 128, 128, 8
    $region9: #{tpu_custom_call.1} parent=1 // pred_fallthru
      _
    // Predicated region
    $region10: #{tpu_custom_call.1} parent=1 // pred_check
      _
    $region11: #{tpu_custom_call.1} parent=1 // pred_check_branch
      %38 = sbr.rel (0) target = $region13
    $region12: #{tpu_custom_call.1} parent=1 // pred_region
      _
    $region13: #{tpu_custom_call.1} parent=1 // pred_fallthru
      _
    // Predicated region
    $region14: #{tpu_custom_call.1} parent=1 // pred_check
      _
    $region15: #{tpu_custom_call.1} parent=1 // pred_check_branch
      %40 = sbr.rel (0) target = $region17
    $region16: #{tpu_custom_call.1} parent=1 // pred_region
      %s42 = ssub.s32 2048, 2048
      %43 = vsyncadd [#allocation5], %s42
      %s44 = sshll.u32 [#allocation6], 4
      %s45 = int_to_ptr.vmem [resolvable:$true] %s44
      %50 = dma.hbm_to_vmem [thread:$0]  %s3, 2048, %s45, [#allocation5], 128, 128, 8
    $region17: #{tpu_custom_call.1} parent=1 // pred_fallthru
      _
    // Predicated region
    $region18: #{tpu_custom_call.1} parent=1 // pred_check
      _
    $region19: #{tpu_custom_call.1} parent=1 // pred_check_branch
      %52 = sbr.rel (0) target = $region21
    $region20: #{tpu_custom_call.1} parent=1 // pred_region
      _
    $region21: #{tpu_custom_call.1} parent=1 // pred_fallthru
      _
    // Predicated region
    $region22: #{tpu_custom_call.1} parent=1 // pred_check
      _
    $region23: #{tpu_custom_call.1} parent=1 // pred_check_branch
      %54 = sbr.rel (0) target = $region25
    $region24: #{tpu_custom_call.1} parent=1 // pred_region
      %s56 = ssub.s32 2048, 2048
      %57 = vsyncadd [#allocation8], %s56
      %s58 = sshll.u32 [#allocation7], 4
      %s59 = int_to_ptr.vmem [resolvable:$true] %s58
      %64 = dma.hbm_to_vmem [thread:$0]  %s5, 2048, %s59, [#allocation8], 128, 128, 8
    $region25: #{tpu_custom_call.1} parent=1 // pred_fallthru
      _
    // Predicated region
    $region26: #{tpu_custom_call.1} parent=1 // pred_check
      _
    $region27: #{tpu_custom_call.1} parent=1 // pred_check_branch
      %66 = sbr.rel (0) target = $region29
    $region28: #{tpu_custom_call.1} parent=1 // pred_region
      _
    $region29: #{tpu_custom_call.1} parent=1 // pred_fallthru
      _
    // Predicated region
    $region30: #{tpu_custom_call.1} parent=1 // pred_check
      _
    $region31: #{tpu_custom_call.1} parent=1 // pred_check_branch
      %68 = sbr.rel (0) target = $region33
    $region32: #{tpu_custom_call.1} parent=1 // pred_region
      %69 = dma.done [#allocation3], 128
    $region33: #{tpu_custom_call.1} parent=1 // pred_fallthru
      _
    // Predicated region
    $region34: #{tpu_custom_call.1} parent=1 // pred_check
      _
    $region35: #{tpu_custom_call.1} parent=1 // pred_check_branch
      %71 = sbr.rel (0) target = $region37
    $region36: #{tpu_custom_call.1} parent=1 // pred_region
      %72 = dma.done [#allocation5], 512
    $region37: #{tpu_custom_call.1} parent=1 // pred_fallthru
      _
    // Predicated region
    $region38: #{tpu_custom_call.1} parent=1 // pred_check
      _
    $region39: #{tpu_custom_call.1} parent=1 // pred_check_branch
      %74 = sbr.rel (0) target = $region41
    $region40: #{tpu_custom_call.1} parent=1 // pred_region
      %75 = dma.done [#allocation5], 2048
    $region41: #{tpu_custom_call.1} parent=1 // pred_fallthru
      _
    // Predicated region
    $region42: #{tpu_custom_call.1} parent=1 // pred_check
      _
    $region43: #{tpu_custom_call.1} parent=1 // pred_check_branch
      %77 = sbr.rel (0) target = $region45
    $region44: #{tpu_custom_call.1} parent=1 // pred_region
      %78 = dma.done [#allocation8], 2048
    $region45: #{tpu_custom_call.1} parent=1 // pred_fallthru
      _
    %v79 = vld [vmem:[#allocation2] sm:$0xff]
    %v80 = vld [vmem:[#allocation4] sm:$0xff]
    %v81 = vld [vmem:[#allocation4 + $0x8] sm:$0xff]
    %v82 = vld [vmem:[#allocation4 + $0x10] sm:$0xff]
    %v83 = vld [vmem:[#allocation4 + $0x18] sm:$0xff]
    %v84 = vld [vmem:[%s2] sm:$0x1]
    %v86 = vlaneseq
    %v87 = vshrl.u32 %v86, 7
    %v88 = vsub.s32 0, %v87
    %v89 = vrot.slane %v84, %v88
    %vm91 = vcmask 261120
    %v93 = vsel %vm91, %v79, 0
    %95 = vmatprep.subr.mxu0 0.0
    %96 = vmatpush1.msra.mxu0 %v80
    %97 = vmatprep.subr.mxu0 0.0
    %98 = vmatpush1.msra.mxu0 %v81
    %99 = vmatprep.subr.mxu0 0.0
    %100 = vmatpush1.msra.mxu0 %v82
    %101 = vmatprep.subr.mxu0 0.0
    %102 = vmatpush1.msra.mxu0 %v83
    %103 = vmatprep.subr.mxu0 0.0
    %104 = vmatpush1.msra.mxu0 0.0
    %105 = vmatprep.subr.mxu0 0.0
    %106 = vmatpush1.msra.mxu0 0.0
    %107 = vmatprep.subr.mxu0 0.0
    %108 = vmatpush1.msra.mxu0 0.0
    %109 = vmatprep.subr.mxu0 0.0
    %110 = vmatpush1.msra.mxu0 0.0
    %111 = vmatprep.subr.mxu0 0.0
    %112 = vmatpush1.msra.mxu0 0.0
    %113 = vmatprep.subr.mxu0 0.0
    %114 = vmatpush1.msra.mxu0 0.0
    %115 = vmatprep.subr.mxu0 0.0
    %116 = vmatpush1.msra.mxu0 0.0
    %117 = vmatprep.subr.mxu0 0.0
    %118 = vmatpush1.msra.mxu0 0.0
    %119 = vmatprep.subr.mxu0 0.0
    %120 = vmatpush1.msra.mxu0 0.0
    %121 = vmatprep.subr.mxu0 0.0
    %122 = vmatpush1.msra.mxu0 0.0
    %123 = vmatprep.subr.mxu0 0.0
    %124 = vmatpush1.msra.mxu0 0.0
    %125 = vmatprep.subr.mxu0 0.0
    %126 = vmatpush1.msra.mxu0 0.0
    %127 = vmatprep.subr.mxu0 0.0
    %128 = vmatpush1.msra.mxu0 0.0
    %129 = vmatprep.subr.mxu0 0.0
    %130 = vmatpush1.msra.mxu0 0.0
    %131 = vmatprep.subr.mxu0 0.0
    %132 = vmatpush1.msra.mxu0 0.0
    %133 = vmatprep.subr.mxu0 0.0
    %134 = vmatpush1.msra.mxu0 0.0
    %135 = vmatprep.subr.mxu0 0.0
    %136 = vmatpush1.msra.mxu0 0.0
    %137 = vmatprep.subr.mxu0 0.0
    %138 = vmatpush1.msra.mxu0 0.0
    %139 = vmatprep.subr.mxu0 0.0
    %140 = vmatpush1.msra.mxu0 0.0
    %141 = vmatprep.subr.mxu0 0.0
    %142 = vmatpush1.msra.mxu0 0.0
    %143 = vmatprep.subr.mxu0 0.0
    %144 = vmatpush1.msra.mxu0 0.0
    %145 = vmatprep.subr.mxu0 0.0
    %146 = vmatpush1.msra.mxu0 0.0
    %147 = vmatprep.subr.mxu0 0.0
    %148 = vmatpush1.msra.mxu0 0.0
    %149 = vmatprep.subr.mxu0 0.0
    %150 = vmatpush1.msra.mxu0 0.0
    %151 = vmatprep.subr.mxu0 0.0
    %152 = vmatpush1.msra.mxu0 0.0
    %153 = vmatprep.subr.mxu0 0.0
    %154 = vmatpush1.msra.mxu0 0.0
    %155 = vmatprep.subr.mxu0 0.0
    %156 = vmatpush1.msra.mxu0 0.0
    %157 = vmatprep.subr.mxu0 0.0
    %158 = vmatpush1.msra.mxu0 0.0
    %159 = vmatprep.mubr.f32.mxu0 0.0
    %160 = vmatmul.mubr.f32.gmra.mrb[0].mxu0 %v93
    %v161 = vpop.f32.mrb[0].mxu0
    %v162 = vadd.f32 %v89, %v161
    %v163 = vpop.f32.mrb[0].mxu0
    %164 = vdwg.mxu0
    %v165 = vmax.f32 %v162, 0.0
    %v166 = vld [vmem:[#allocation6] sm:$0xff]
    %v167 = vld [vmem:[#allocation6 + $0x8] sm:$0xff]
    %v168 = vld [vmem:[#allocation6 + $0x10] sm:$0xff]
    %v169 = vld [vmem:[#allocation6 + $0x18] sm:$0xff]
    %v170 = vld [vmem:[#allocation6 + $0x20] sm:$0xff]
    %v171 = vld [vmem:[#allocation6 + $0x28] sm:$0xff]
    %v172 = vld [vmem:[#allocation6 + $0x30] sm:$0xff]
    %v173 = vld [vmem:[#allocation6 + $0x38] sm:$0xff]
    %v174 = vld [vmem:[#allocation6 + $0x40] sm:$0xff]
    %v175 = vld [vmem:[#allocation6 + $0x48] sm:$0xff]
    %v176 = vld [vmem:[#allocation6 + $0x50] sm:$0xff]
    %v177 = vld [vmem:[#allocation6 + $0x58] sm:$0xff]
    %v178 = vld [vmem:[#allocation6 + $0x60] sm:$0xff]
    %v179 = vld [vmem:[#allocation6 + $0x68] sm:$0xff]
    %v180 = vld [vmem:[#allocation6 + $0x70] sm:$0xff]
    %v181 = vld [vmem:[#allocation6 + $0x78] sm:$0xff]
    %v182 = vld [vmem:[%s4] sm:$0x1]
    %v184 = vlaneseq
    %v185 = vshrl.u32 %v184, 7
    %v186 = vsub.s32 0, %v185
    %v187 = vrot.slane %v182, %v186
    %189 = vmatprep.subr.mxu0 0.0
    %190 = vmatpush1.msra.mxu0 %v166
    %191 = vmatprep.subr.mxu0 0.0
    %192 = vmatpush1.msra.mxu0 %v167
    %193 = vmatprep.subr.mxu0 0.0
    %194 = vmatpush1.msra.mxu0 %v168
    %195 = vmatprep.subr.mxu0 0.0
    %196 = vmatpush1.msra.mxu0 %v169
    %197 = vmatprep.subr.mxu0 0.0
    %198 = vmatpush1.msra.mxu0 %v170
    %199 = vmatprep.subr.mxu0 0.0
    %200 = vmatpush1.msra.mxu0 %v171
    %201 = vmatprep.subr.mxu0 0.0
    %202 = vmatpush1.msra.mxu0 %v172
    %203 = vmatprep.subr.mxu0 0.0
    %204 = vmatpush1.msra.mxu0 %v173
    %205 = vmatprep.subr.mxu0 0.0
    %206 = vmatpush1.msra.mxu0 %v174
    %207 = vmatprep.subr.mxu0 0.0
    %208 = vmatpush1.msra.mxu0 %v175
    %209 = vmatprep.subr.mxu0 0.0
    %210 = vmatpush1.msra.mxu0 %v176
    %211 = vmatprep.subr.mxu0 0.0
    %212 = vmatpush1.msra.mxu0 %v177
    %213 = vmatprep.subr.mxu0 0.0
    %214 = vmatpush1.msra.mxu0 %v178
    %215 = vmatprep.subr.mxu0 0.0
    %216 = vmatpush1.msra.mxu0 %v179
    %217 = vmatprep.subr.mxu0 0.0
    %218 = vmatpush1.msra.mxu0 %v180
    %219 = vmatprep.subr.mxu0 0.0
    %220 = vmatpush1.msra.mxu0 %v181
    %221 = vmatprep.subr.mxu0 0.0
    %222 = vmatpush1.msra.mxu0 0.0
    %223 = vmatprep.subr.mxu0 0.0
    %224 = vmatpush1.msra.mxu0 0.0
    %225 = vmatprep.subr.mxu0 0.0
    %226 = vmatpush1.msra.mxu0 0.0
    %227 = vmatprep.subr.mxu0 0.0
    %228 = vmatpush1.msra.mxu0 0.0
    %229 = vmatprep.subr.mxu0 0.0
    %230 = vmatpush1.msra.mxu0 0.0
    %231 = vmatprep.subr.mxu0 0.0
    %232 = vmatpush1.msra.mxu0 0.0
    %233 = vmatprep.subr.mxu0 0.0
    %234 = vmatpush1.msra.mxu0 0.0
    %235 = vmatprep.subr.mxu0 0.0
    %236 = vmatpush1.msra.mxu0 0.0
    %237 = vmatprep.subr.mxu0 0.0
    %238 = vmatpush1.msra.mxu0 0.0
    %239 = vmatprep.subr.mxu0 0.0
    %240 = vmatpush1.msra.mxu0 0.0
    %241 = vmatprep.subr.mxu0 0.0
    %242 = vmatpush1.msra.mxu0 0.0
    %243 = vmatprep.subr.mxu0 0.0
    %244 = vmatpush1.msra.mxu0 0.0
    %245 = vmatprep.subr.mxu0 0.0
    %246 = vmatpush1.msra.mxu0 0.0
    %247 = vmatprep.subr.mxu0 0.0
    %248 = vmatpush1.msra.mxu0 0.0
    %249 = vmatprep.subr.mxu0 0.0
    %250 = vmatpush1.msra.mxu0 0.0
    %251 = vmatprep.subr.mxu0 0.0
    %252 = vmatpush1.msra.mxu0 0.0
    %253 = vmatprep.mubr.f32.mxu0 0.0
    %254 = vmatmul.mubr.f32.gmra.mrb[0].mxu0 %v165
    %v255 = vpop.f32.mrb[0].mxu0
    %v256 = vadd.f32 %v187, %v255
    %v257 = vpop.f32.mrb[0].mxu0
    %258 = vdwg.mxu0
    %v259 = vmax.f32 %v256, 0.0
    %v260 = vld [vmem:[#allocation7] sm:$0xff]
    %v261 = vld [vmem:[#allocation7 + $0x8] sm:$0xff]
    %v262 = vld [vmem:[#allocation7 + $0x10] sm:$0xff]
    %v263 = vld [vmem:[#allocation7 + $0x18] sm:$0xff]
    %v264 = vld [vmem:[#allocation7 + $0x20] sm:$0xff]
    %v265 = vld [vmem:[#allocation7 + $0x28] sm:$0xff]
    %v266 = vld [vmem:[#allocation7 + $0x30] sm:$0xff]
    %v267 = vld [vmem:[#allocation7 + $0x38] sm:$0xff]
    %v268 = vld [vmem:[#allocation7 + $0x40] sm:$0xff]
    %v269 = vld [vmem:[#allocation7 + $0x48] sm:$0xff]
    %v270 = vld [vmem:[#allocation7 + $0x50] sm:$0xff]
    %v271 = vld [vmem:[#allocation7 + $0x58] sm:$0xff]
    %v272 = vld [vmem:[#allocation7 + $0x60] sm:$0xff]
    %v273 = vld [vmem:[#allocation7 + $0x68] sm:$0xff]
    %v274 = vld [vmem:[#allocation7 + $0x70] sm:$0xff]
    %v275 = vld [vmem:[#allocation7 + $0x78] sm:$0xff]
    %v276 = vld [vmem:[%s6] sm:$0x1]
    %v278 = vlaneseq
    %v279 = vshrl.u32 %v278, 7
    %v280 = vsub.s32 0, %v279
    %v281 = vrot.slane %v276, %v280
    %283 = vmatprep.subr.mxu0 0.0
    %284 = vmatpush1.msra.mxu0 %v260
    %285 = vmatprep.subr.mxu0 0.0
    %286 = vmatpush1.msra.mxu0 %v261
    %287 = vmatprep.subr.mxu0 0.0
    %288 = vmatpush1.msra.mxu0 %v262
    %289 = vmatprep.subr.mxu0 0.0
    %290 = vmatpush1.msra.mxu0 %v263
    %291 = vmatprep.subr.mxu0 0.0
    %292 = vmatpush1.msra.mxu0 %v264
    %293 = vmatprep.subr.mxu0 0.0
    %294 = vmatpush1.msra.mxu0 %v265
    %295 = vmatprep.subr.mxu0 0.0
    %296 = vmatpush1.msra.mxu0 %v266
    %297 = vmatprep.subr.mxu0 0.0
    %298 = vmatpush1.msra.mxu0 %v267
    %299 = vmatprep.subr.mxu0 0.0
    %300 = vmatpush1.msra.mxu0 %v268
    %301 = vmatprep.subr.mxu0 0.0
    %302 = vmatpush1.msra.mxu0 %v269
    %303 = vmatprep.subr.mxu0 0.0
    %304 = vmatpush1.msra.mxu0 %v270
    %305 = vmatprep.subr.mxu0 0.0
    %306 = vmatpush1.msra.mxu0 %v271
    %307 = vmatprep.subr.mxu0 0.0
    %308 = vmatpush1.msra.mxu0 %v272
    %309 = vmatprep.subr.mxu0 0.0
    %310 = vmatpush1.msra.mxu0 %v273
    %311 = vmatprep.subr.mxu0 0.0
    %312 = vmatpush1.msra.mxu0 %v274
    %313 = vmatprep.subr.mxu0 0.0
    %314 = vmatpush1.msra.mxu0 %v275
    %315 = vmatprep.subr.mxu0 0.0
    %316 = vmatpush1.msra.mxu0 0.0
    %317 = vmatprep.subr.mxu0 0.0
    %318 = vmatpush1.msra.mxu0 0.0
    %319 = vmatprep.subr.mxu0 0.0
    %320 = vmatpush1.msra.mxu0 0.0
    %321 = vmatprep.subr.mxu0 0.0
    %322 = vmatpush1.msra.mxu0 0.0
    %323 = vmatprep.subr.mxu0 0.0
    %324 = vmatpush1.msra.mxu0 0.0
    %325 = vmatprep.subr.mxu0 0.0
    %326 = vmatpush1.msra.mxu0 0.0
    %327 = vmatprep.subr.mxu0 0.0
    %328 = vmatpush1.msra.mxu0 0.0
    %329 = vmatprep.subr.mxu0 0.0
    %330 = vmatpush1.msra.mxu0 0.0
    %331 = vmatprep.subr.mxu0 0.0
    %332 = vmatpush1.msra.mxu0 0.0
    %333 = vmatprep.subr.mxu0 0.0
    %334 = vmatpush1.msra.mxu0 0.0
    %335 = vmatprep.subr.mxu0 0.0
    %336 = vmatpush1.msra.mxu0 0.0
    %337 = vmatprep.subr.mxu0 0.0
    %338 = vmatpush1.msra.mxu0 0.0
    %339 = vmatprep.subr.mxu0 0.0
    %340 = vmatpush1.msra.mxu0 0.0
    %341 = vmatprep.subr.mxu0 0.0
    %342 = vmatpush1.msra.mxu0 0.0
    %343 = vmatprep.subr.mxu0 0.0
    %344 = vmatpush1.msra.mxu0 0.0
    %345 = vmatprep.subr.mxu0 0.0
    %346 = vmatpush1.msra.mxu0 0.0
    %347 = vmatprep.mubr.f32.mxu0 0.0
    %348 = vmatmul.mubr.f32.gmra.mrb[0].mxu0 %v259
    %v349 = vpop.f32.mrb[0].mxu0
    %v350 = vadd.f32 %v281, %v349
    %v351 = vpop.f32.mrb[0].mxu0
    %352 = vdwg.mxu0
    %353 = vmax.xlane.f32.xlu0 %v350
    %v354 = vpop.xlane.xlu0 %353
    %v355 = vsub.f32 %v350, %v354
    %v356 = vmul.f32 %v355, 1.442695
    %v357 = vpow.pop %v356
    %358 = vadd.xlane.f32.xlu0 %v357
    %v359 = vpop.xlane.xlu0 %358
    %v360 = vrcp.pop %v359
    %v361 = vmul.f32 %v357, %v360
    %vm362 = vcmask 23552
    %363 = vst.msk [vmem:[%s7] sm:$0xff] %vm362, %v361
    // Predicated region
    $region46: #{tpu_custom_call.1} parent=1 // pred_check
      _
    $region47: #{tpu_custom_call.1} parent=1 // pred_check_branch
      %365 = sbr.rel (0) target = $region49
    $region48: #{tpu_custom_call.1} parent=1 // pred_region
      _
    $region49: #{tpu_custom_call.1} parent=1 // pred_fallthru
      _
    // Predicated region
    $region50: #{tpu_custom_call.1} parent=1 // pred_check
      _
    $region51: #{tpu_custom_call.1} parent=1 // pred_check_branch
      %367 = sbr.rel (0) target = $region53
    $region52: #{tpu_custom_call.1} parent=1 // pred_region
      _
    $region53: #{tpu_custom_call.1} parent=1 // pred_fallthru
      _
    %368 = vsyncpa [#allocation3], 1
    %369 = vsyncpa [#allocation5], 1
    %370 = vsyncpa [#allocation8], 1

</llo_original>
